<compile_context>
chip_gen: v7x
topology: tpu7x:2x2x1
jax: 0.10.0
libtpu: 0.0.40
codegen_flags: <defaults>
</compile_context>

<pallas_src>
import functools

import jax
import jax.numpy as jnp
from jax.experimental import pallas as pl
from jax.experimental.pallas import tpu as pltpu

LANES = 128
MAX_TILE_ROWS = 1024   # 1024 x 128 f32 = 512 KiB per input per buffer
NUM_SPLITS = 2         # leading "parallel" grid axis (v7x: one per TensorCore)


def _round_up(x, m):
    return ((x + m - 1) // m) * m


def _dice_kernel(pred_ref, target_ref, out_ref, acc_i_ref, acc_s_ref, *,
                 tile_r, tiles_per_split, valid_rows, need_mask):
    c = pl.program_id(0)   # split index ("parallel")
    k = pl.program_id(1)   # streaming reduction step ("arbitrary")

    @pl.when(k == 0)
    def _init():
        acc_i_ref[...] = jnp.zeros_like(acc_i_ref)
        acc_s_ref[...] = jnp.zeros_like(acc_s_ref)

    p = pred_ref[...].astype(jnp.float32)
    t = target_ref[...].astype(jnp.float32)

    if need_mask:
        base = (c * tiles_per_split + k) * tile_r
        row = base + jax.lax.broadcasted_iota(jnp.int32, (tile_r, LANES), 0)
        mask = row < valid_rows
        p = jnp.where(mask, p, 0.0)
        t = jnp.where(mask, t, 0.0)

    acc_i_ref[...] += p * t      # elementwise; one XLU reduce at the very end
    acc_s_ref[...] += p + t      # sum(p) + sum(t) folded into one accumulator

    @pl.when(k == pl.num_programs(1) - 1)
    def _finalize():
        out_ref[0, 0] = jnp.sum(acc_i_ref[...])
        out_ref[0, 1] = jnp.sum(acc_s_ref[...])


def dice_loss(pred, target, *, max_tile_rows=MAX_TILE_ROWS,
              num_splits=NUM_SPLITS):
    """Soft Dice loss matching the PyTorch `Dice` module. Returns a scalar f32."""
    assert pred.shape == target.shape
    n = pred.size
    smooth = jnp.float32(1.0)

    def _flat2d(x):
        x = jnp.reshape(x, (-1,))
        rem = n % LANES
        if rem:
            # Only when numel isn't lane-aligned: pad <=127 zeros (sum-neutral).
            x = jnp.pad(x, (0, LANES - rem))
        return jnp.reshape(x, (-1, LANES))

    p2d = _flat2d(pred)
    t2d = _flat2d(target)
    rows = p2d.shape[0]

    # Sublane multiple required by the narrower dtype (f32:8, bf16:16, int8:32).
    sub = max(max(8, 32 // jnp.dtype(p2d.dtype).itemsize),
              max(8, 32 // jnp.dtype(t2d.dtype).itemsize))
    tile_r = min(_round_up(max_tile_rows, sub), _round_up(rows, sub))
    num_tiles = pl.cdiv(rows, tile_r)
    n_splits = num_splits if num_tiles >= num_splits else 1
    tiles_per_split = pl.cdiv(num_tiles, n_splits)

    covered_rows = n_splits * tiles_per_split * tile_r
    need_mask = covered_rows != rows
    need_clamp = n_splits * tiles_per_split > num_tiles
    last_block = num_tiles - 1

    def in_map(c, k):
        blk = c * tiles_per_split + k
        if need_clamp:
            # Fully out-of-range blocks re-read the last valid block; their
            # contribution is zeroed by the in-kernel row mask.
            blk = jnp.minimum(blk, last_block)
        return (blk, 0)

    kernel = functools.partial(
        _dice_kernel, tile_r=tile_r, tiles_per_split=tiles_per_split,
        valid_rows=rows, need_mask=need_mask)

    partials = pl.pallas_call(
        kernel,
        out_shape=jax.ShapeDtypeStruct((n_splits, 2), jnp.float32),
        grid_spec=pltpu.PrefetchScalarGridSpec(
            num_scalar_prefetch=0,
            grid=(n_splits, tiles_per_split),
            in_specs=[
                pl.BlockSpec((tile_r, LANES), in_map),
                pl.BlockSpec((tile_r, LANES), in_map),
            ],
            out_specs=pl.BlockSpec((1, 2), lambda c, k: (c, 0),
                                   memory_space=pltpu.SMEM),
            scratch_shapes=[
                pltpu.VMEM((tile_r, LANES), jnp.float32),
                pltpu.VMEM((tile_r, LANES), jnp.float32),
            ],
        ),
        compiler_params=pltpu.CompilerParams(
            dimension_semantics=("parallel", "arbitrary")),
    )(p2d, t2d)

    intersection = jnp.sum(partials[:, 0])
    total = jnp.sum(partials[:, 1])
    return 1.0 - (2.0 * intersection + smooth) / (total + smooth)


def dice_loss_ref(pred, target):
    m1 = jnp.reshape(pred, (-1,)).astype(jnp.float32)
    m2 = jnp.reshape(target, (-1,)).astype(jnp.float32)
    smooth = 1.0
    inter = jnp.sum(m1 * m2)
    return 1.0 - (2.0 * inter + smooth) / (jnp.sum(m1) + jnp.sum(m2) + smooth)


def _check(shape, dtype, key):
    k1, k2 = jax.random.split(key)
    pred = jax.nn.sigmoid(jax.random.normal(k1, shape, dtype=jnp.float32))
    target = (jax.random.uniform(k2, shape) > 0.5).astype(jnp.float32)
    pred = pred.astype(dtype)
    target = target.astype(dtype)
    loss = jax.block_until_ready(dice_loss(pred, target))
    ref = jax.block_until_ready(dice_loss_ref(pred, target))
    assert jnp.allclose(loss, ref, atol=1e-5, rtol=1e-5), (shape, dtype, loss, ref)
    return loss


if __name__ == "__main__":
    key = jax.random.PRNGKey(0)
    keys = jax.random.split(key, 3)
    # Primary module-sized NCHW case: exact lane fit, single tile.
    _check((2, 4, 16, 16), jnp.float32, keys[0])
    # Exercises the 2-way core split, tail masking and OOB block clamping.
    _check((2, 4, 128, 320), jnp.float32, keys[1])
    # Exercises native bf16 streaming + non-lane-aligned tail.
    _check((2, 3, 5, 7), jnp.bfloat16, keys[2])
    print("KERNEL_OK")
</pallas_src>

<mosaic_0001>
module attributes {stable_mosaic.version = 11 : i64} {
  func.func @_dice_kernel(%arg0: i32, %arg1: i32, %arg2: memref<16x128xf32, #tpu.memory_space<vmem>>, %arg3: memref<16x128xf32, #tpu.memory_space<vmem>>, %arg4: memref<1x2xf32, #tpu.memory_space<smem>>, %arg5: memref<16x128xf32, #tpu.memory_space<vmem>>, %arg6: memref<16x128xf32, #tpu.memory_space<vmem>>) attributes {dimension_semantics = [#tpu.dimension_semantics<parallel>, #tpu.dimension_semantics<arbitrary>], iteration_bounds = array<i64: 1, 1>, scalar_prefetch = 0 : i64, scratch_operands = 2 : i64, tpu.core_type = #tpu.core_type<tc>, window_params = [{transform_indices = @transform_0, window_bounds = array<i64: 16, 128>}, {transform_indices = @transform_1, window_bounds = array<i64: 16, 128>}, {transform_indices = @transform_2, window_bounds = array<i64: 1, 2>}]} {
    %c0_i32 = arith.constant 0 : i32
    %0 = arith.cmpi eq, %arg1, %c0_i32 : i32
    %1 = arith.extui %0 : i1 to i32
    %c0_i32_0 = arith.constant 0 : i32
    %2 = arith.cmpi ne, %1, %c0_i32_0 : i32
    scf.if %2 {
      %cst = arith.constant 0.000000e+00 : f32
      %16 = vector.broadcast %cst : f32 to vector<16x128xf32>
      %c0_14 = arith.constant 0 : index
      %c0_15 = arith.constant 0 : index
      %17 = vector.load %arg5[%c0_14, %c0_15] : memref<16x128xf32, #tpu.memory_space<vmem>>, vector<16x128xf32>
      tpu.vector_store %arg5[%c0_14, %c0_15], %16 {strides = array<i32>} : memref<16x128xf32, #tpu.memory_space<vmem>>, vector<16x128xf32>,
      %cst_16 = arith.constant 0.000000e+00 : f32
      %18 = vector.broadcast %cst_16 : f32 to vector<16x128xf32>
      %c0_17 = arith.constant 0 : index
      %c0_18 = arith.constant 0 : index
      %19 = vector.load %arg6[%c0_17, %c0_18] : memref<16x128xf32, #tpu.memory_space<vmem>>, vector<16x128xf32>
      tpu.vector_store %arg6[%c0_17, %c0_18], %18 {strides = array<i32>} : memref<16x128xf32, #tpu.memory_space<vmem>>, vector<16x128xf32>,
    } else {
    }
    %c0 = arith.constant 0 : index
    %c0_1 = arith.constant 0 : index
    %3 = vector.load %arg2[%c0, %c0_1] : memref<16x128xf32, #tpu.memory_space<vmem>>, vector<16x128xf32>
    %c0_2 = arith.constant 0 : index
    %c0_3 = arith.constant 0 : index
    %4 = vector.load %arg3[%c0_2, %c0_3] : memref<16x128xf32, #tpu.memory_space<vmem>>, vector<16x128xf32>
    %c0_4 = arith.constant 0 : index
    %c0_5 = arith.constant 0 : index
    %5 = vector.load %arg5[%c0_4, %c0_5] : memref<16x128xf32, #tpu.memory_space<vmem>>, vector<16x128xf32>
    %6 = arith.mulf %3, %4 : vector<16x128xf32>
    %7 = arith.addf %5, %6 : vector<16x128xf32>
    %c0_6 = arith.constant 0 : index
    %c0_7 = arith.constant 0 : index
    %8 = vector.load %arg5[%c0_6, %c0_7] : memref<16x128xf32, #tpu.memory_space<vmem>>, vector<16x128xf32>
    tpu.vector_store %arg5[%c0_6, %c0_7], %7 {strides = array<i32>} : memref<16x128xf32, #tpu.memory_space<vmem>>, vector<16x128xf32>,
    %c0_8 = arith.constant 0 : index
    %c0_9 = arith.constant 0 : index
    %9 = vector.load %arg6[%c0_8, %c0_9] : memref<16x128xf32, #tpu.memory_space<vmem>>, vector<16x128xf32>
    %10 = arith.addf %3, %4 : vector<16x128xf32>
    %11 = arith.addf %9, %10 : vector<16x128xf32>
    %c0_10 = arith.constant 0 : index
    %c0_11 = arith.constant 0 : index
    %12 = vector.load %arg6[%c0_10, %c0_11] : memref<16x128xf32, #tpu.memory_space<vmem>>, vector<16x128xf32>
    tpu.vector_store %arg6[%c0_10, %c0_11], %11 {strides = array<i32>} : memref<16x128xf32, #tpu.memory_space<vmem>>, vector<16x128xf32>,
    %c0_i32_12 = arith.constant 0 : i32
    %13 = arith.cmpi eq, %arg1, %c0_i32_12 : i32
    %14 = arith.extui %13 : i1 to i32
    %c0_i32_13 = arith.constant 0 : i32
    %15 = arith.cmpi ne, %14, %c0_i32_13 : i32
    scf.if %15 {
      %c0_14 = arith.constant 0 : index
      %c0_15 = arith.constant 0 : index
      %16 = vector.load %arg5[%c0_14, %c0_15] : memref<16x128xf32, #tpu.memory_space<vmem>>, vector<16x128xf32>
      %17 = vector.shape_cast %16 : vector<16x128xf32> to vector<1x16x128xf32>
      %cst = arith.constant dense<0.000000e+00> : vector<1xf32>
      %18 = vector.multi_reduction <add>, %17, %cst [1, 2] : vector<1x16x128xf32> to vector<1xf32>
      %19 = vector.shape_cast %18 : vector<1xf32> to vector<1x1x1xf32>
      %20 = vector.extract %19[0, 0, 0] : f32 from vector<1x1x1xf32>
      %c0_16 = arith.constant 0 : index
      %c0_17 = arith.constant 0 : index
      %21 = memref.load %arg4[%c0_16, %c0_17] : memref<1x2xf32, #tpu.memory_space<smem>>
      memref.store %20, %arg4[%c0_16, %c0_17] : memref<1x2xf32, #tpu.memory_space<smem>>
      %c0_18 = arith.constant 0 : index
      %c0_19 = arith.constant 0 : index
      %22 = vector.load %arg6[%c0_18, %c0_19] : memref<16x128xf32, #tpu.memory_space<vmem>>, vector<16x128xf32>
      %23 = vector.shape_cast %22 : vector<16x128xf32> to vector<1x16x128xf32>
      %cst_20 = arith.constant dense<0.000000e+00> : vector<1xf32>
      %24 = vector.multi_reduction <add>, %23, %cst_20 [1, 2] : vector<1x16x128xf32> to vector<1xf32>
      %25 = vector.shape_cast %24 : vector<1xf32> to vector<1x1x1xf32>
      %26 = vector.extract %25[0, 0, 0] : f32 from vector<1x1x1xf32>
      %c0_21 = arith.constant 0 : index
      %c1 = arith.constant 1 : index
      %27 = memref.load %arg4[%c0_21, %c1] : memref<1x2xf32, #tpu.memory_space<smem>>
      memref.store %26, %arg4[%c0_21, %c1] : memref<1x2xf32, #tpu.memory_space<smem>>
    } else {
    }
    return
  }
  func.func @transform_0(%arg0: i32, %arg1: i32) -> (i32, i32) {
    %c1_i32 = arith.constant 1 : i32
    %0 = arith.muli %arg0, %c1_i32 : i32
    %1 = arith.addi %0, %arg1 : i32
    %c0_i32 = arith.constant 0 : i32
    %c0_i32_0 = arith.constant 0 : i32
    return %1, %c0_i32 : i32, i32
  }
  func.func @transform_1(%arg0: i32, %arg1: i32) -> (i32, i32) {
    %c1_i32 = arith.constant 1 : i32
    %0 = arith.muli %arg0, %c1_i32 : i32
    %1 = arith.addi %0, %arg1 : i32
    %c0_i32 = arith.constant 0 : i32
    %c0_i32_0 = arith.constant 0 : i32
    return %1, %c0_i32 : i32, i32
  }
  func.func @transform_2(%arg0: i32, %arg1: i32) -> (i32, i32) {
    %c0_i32 = arith.constant 0 : i32
    %c0_i32_0 = arith.constant 0 : i32
    return %arg0, %c0_i32 : i32, i32
  }
}

</mosaic_0001>

<llo_original>
// kernel: tpu_custom_call.1
$region0: #{tpu_custom_call.1}
  #allocation0 [shape = 'u32[]', space=smem, size = 0x4, offset = 0x4, fixed_abs, tag = 'smem constant byte address 0x4 - core index']
  #allocation1 [shape = 'u32[144,128]{1,0:T(1,128)}', space=vmem, size = 0x12000, scoped, tag = 'internal scratch']
  #allocation2 [shape = 'f32[16,128]{1,0:T(8,128)}', space=vmem, size = 0x2000, scoped, tag = 'scratch operand']
  #allocation3 [shape = 'f32[16,128]{1,0:T(8,128)}', space=vmem, size = 0x2000, scoped, tag = 'scratch operand']
  %s0 = inlined_call_operand.hbm [shape: f32[16,128], index: 0, kind: input, shape index: {}]
  %s1 = inlined_call_operand.hbm [shape: f32[16,128], index: 1, kind: input, shape index: {}]
  %s2 = inlined_call_operand.hbm [shape: f32[1,2], index: 2, kind: output, shape index: {}]
  %s3 = sld [smem:[#allocation0]]
  $region34: #{tpu_custom_call.1} parent=0
    _
  %s5 = ssub.s32 1, %s3
  %s6 = scalar_select 0, %s5, %s3
  $region1: #{tpu_custom_call.1} parent=0
    #allocation4 [shape = 'u8[8192]{0}', space=vmem, size = 0x2000, scoped, tag = 'input window, operand 0, single buffered']
    #allocation5 [shape = 's32[1]{0}', space=sflag, size = 0x4, scoped, tag = 'scoped memory for tpu_custom_call.1']
    #allocation6 [shape = 's32[1]{0}', space=sflag, size = 0x4, scoped, tag = 'scoped memory for tpu_custom_call.1']
    #allocation7 [shape = 'u8[8192]{0}', space=vmem, size = 0x2000, scoped, tag = 'input window, operand 1, single buffered']
    #allocation8 [shape = 's32[1]{0}', space=sflag, size = 0x4, scoped, tag = 'scoped memory for tpu_custom_call.1']
    #allocation9 [shape = 'u8[512]{0}', space=smem, size = 0x200, scoped, tag = 'output window, operand 0, single buffered']
    %7 = vsyncpa [#allocation5], 0
    %8 = vsyncpa [#allocation8], 0
    %9 = vsyncpa [#allocation6], 0
    // Predicated region
    $region2: #{tpu_custom_call.1} parent=1 // pred_check
      _
    $region3: #{tpu_custom_call.1} parent=1 // pred_check_branch
      %11 = sbr.rel (0) target = $region5
    $region4: #{tpu_custom_call.1} parent=1 // pred_region
      %s12 = sadd.s32 0, 0
      %s13 = smul.u32 2, %s12
      %s15 = ssub.s32 256, 256
      %16 = vsyncadd [#allocation5], %s15
      %s17 = smul.addr %s13, 128
      %s18 = scalar_lea.hbm %s0, %s17
      %s19 = sshll.u32 [#allocation4], 4
      %s20 = int_to_ptr.vmem [resolvable:$true] %s19
      %25 = dma.hbm_to_vmem [thread:$0]  %s18, 256, %s20, [#allocation5], 128, 128, 8
    $region5: #{tpu_custom_call.1} parent=1 // pred_fallthru
      _
    // Predicated region
    $region6: #{tpu_custom_call.1} parent=1 // pred_check
      _
    $region7: #{tpu_custom_call.1} parent=1 // pred_check_branch
      %27 = sbr.rel (0) target = $region9
    $region8: #{tpu_custom_call.1} parent=1 // pred_region
      %s28 = sadd.s32 0, 0
      %s29 = smul.u32 2, %s28
      %s31 = ssub.s32 256, 256
      %32 = vsyncadd [#allocation8], %s31
      %s33 = smul.addr %s29, 128
      %s34 = scalar_lea.hbm %s1, %s33
      %s35 = sshll.u32 [#allocation7], 4
      %s36 = int_to_ptr.vmem [resolvable:$true] %s35
      %41 = dma.hbm_to_vmem [thread:$0]  %s34, 256, %s36, [#allocation8], 128, 128, 8
    $region9: #{tpu_custom_call.1} parent=1 // pred_fallthru
      _
    // Predicated region
    $region10: #{tpu_custom_call.1} parent=1 // pred_check
      _
    $region11: #{tpu_custom_call.1} parent=1 // pred_check_branch
      %43 = sbr.rel (0) target = $region13
    $region12: #{tpu_custom_call.1} parent=1 // pred_region
      %44 = dma.done [#allocation5], 256
    $region13: #{tpu_custom_call.1} parent=1 // pred_fallthru
      _
    // Predicated region
    $region14: #{tpu_custom_call.1} parent=1 // pred_check
      _
    $region15: #{tpu_custom_call.1} parent=1 // pred_check_branch
      %46 = sbr.rel (0) target = $region17
    $region16: #{tpu_custom_call.1} parent=1 // pred_region
      %47 = dma.done [#allocation8], 256
    $region17: #{tpu_custom_call.1} parent=1 // pred_fallthru
      _
    %s48 = sadd.s32 0, 0
    %s49 = smul.u32 2, %s48
    %s50 = sadd.s32 0, 0
    %s51 = smul.u32 2, %s50
    %p52 = scmp.eq.s32.totalorder 0, 0
    // Predicated region
    $region18: #{tpu_custom_call.1} parent=1 // pred_check
      %p53 = pneg %p52
    $region19: #{tpu_custom_call.1} parent=1 // pred_check_branch
      %55 = sbr.rel (%p53) target = $region21
    $region20: #{tpu_custom_call.1} parent=1 // pred_region
      %56 = vst [vmem:[#allocation2] sm:$0xff] 0.0
      %57 = vst [vmem:[#allocation2 + $0x8] sm:$0xff] 0.0
      %58 = vst [vmem:[#allocation3] sm:$0xff] 0.0
      %59 = vst [vmem:[#allocation3 + $0x8] sm:$0xff] 0.0
    $region21: #{tpu_custom_call.1} parent=1 // pred_fallthru
      _
    %v60 = vld [vmem:[#allocation4] sm:$0xff]
    %v61 = vld [vmem:[#allocation4 + $0x8] sm:$0xff]
    %v62 = vld [vmem:[#allocation7] sm:$0xff]
    %v63 = vld [vmem:[#allocation7 + $0x8] sm:$0xff]
    %v64 = vld [vmem:[#allocation2] sm:$0xff]
    %v65 = vld [vmem:[#allocation2 + $0x8] sm:$0xff]
    %v66 = vmul.f32 %v60, %v62
    %v67 = vmul.f32 %v61, %v63
    %v68 = vadd.f32 %v64, %v66
    %v69 = vadd.f32 %v65, %v67
    %70 = vst [vmem:[#allocation2] sm:$0xff] %v68
    %71 = vst [vmem:[#allocation2 + $0x8] sm:$0xff] %v69
    %v72 = vld [vmem:[#allocation3] sm:$0xff]
    %v73 = vld [vmem:[#allocation3 + $0x8] sm:$0xff]
    %v74 = vadd.f32 %v60, %v62
    %v75 = vadd.f32 %v61, %v63
    %v76 = vadd.f32 %v72, %v74
    %v77 = vadd.f32 %v73, %v75
    %78 = vst [vmem:[#allocation3] sm:$0xff] %v76
    %79 = vst [vmem:[#allocation3 + $0x8] sm:$0xff] %v77
    // Predicated region
    $region22: #{tpu_custom_call.1} parent=1 // pred_check
      %p80 = pneg %p52
    $region23: #{tpu_custom_call.1} parent=1 // pred_check_branch
      %82 = sbr.rel (%p80) target = $region25
    $region24: #{tpu_custom_call.1} parent=1 // pred_region
      %v83 = vld [vmem:[#allocation2] sm:$0xff]
      %v84 = vld [vmem:[#allocation2 + $0x8] sm:$0xff]
      %v85 = vadd.f32 %v83, %v84
      %86 = vadd.xlane.f32.xlu0 %v85
      %v87 = vpop.xlane.xlu0 %86
      %v88 = vrot.slane %v87, 4
      %v89 = vadd.f32 %v87, %v88
      %v90 = vrot.slane %v89, 2
      %v91 = vadd.f32 %v89, %v90
      %v92 = vrot.slane %v91, 1
      %v93 = vadd.f32 %v91, %v92
      %s94 = vtos %v93
      %s95 = scalar_lea.smem [#allocation9], 0
      %96 = sst [smem:[%s95]] %s94
      %v97 = vld [vmem:[#allocation3] sm:$0xff]
      %v98 = vld [vmem:[#allocation3 + $0x8] sm:$0xff]
      %v99 = vadd.f32 %v97, %v98
      %100 = vadd.xlane.f32.xlu0 %v99
      %v101 = vpop.xlane.xlu0 %100
      %v102 = vrot.slane %v101, 4
      %v103 = vadd.f32 %v101, %v102
      %v104 = vrot.slane %v103, 2
      %v105 = vadd.f32 %v103, %v104
      %v106 = vrot.slane %v105, 1
      %v107 = vadd.f32 %v105, %v106
      %s108 = vtos %v107
      %s109 = scalar_lea.smem [#allocation9], 1
      %110 = sst [smem:[%s109]] %s108
    $region25: #{tpu_custom_call.1} parent=1 // pred_fallthru
      _
    // Predicated region
    $region26: #{tpu_custom_call.1} parent=1 // pred_check
      _
    $region27: #{tpu_custom_call.1} parent=1 // pred_check_branch
      %112 = sbr.rel (0) target = $region29
    $region28: #{tpu_custom_call.1} parent=1 // pred_region
      %s114 = ssub.s32 16, 16
      %115 = vsyncadd [#allocation6], %s114
      %118 = dma.smem_to_hbm [#allocation9], 16, %s2, [#allocation6]
    $region29: #{tpu_custom_call.1} parent=1 // pred_fallthru
      _
    // Predicated region
    $region30: #{tpu_custom_call.1} parent=1 // pred_check
      _
    $region31: #{tpu_custom_call.1} parent=1 // pred_check_branch
      %120 = sbr.rel (0) target = $region33
    $region32: #{tpu_custom_call.1} parent=1 // pred_region
      %121 = dma.done [#allocation6], 16
    $region33: #{tpu_custom_call.1} parent=1 // pred_fallthru
      _
    %122 = sfence
    %123 = vsyncpa [#allocation5], 1
    %124 = vsyncpa [#allocation8], 1
    %125 = vsyncpa [#allocation6], 1

</llo_original>
